<compile_context>
chip_gen: v6e
topology: v6e:2x2x1
jax: 0.10.0
libtpu: 0.0.40
codegen_flags: <defaults>
</compile_context>

<pallas_src>
import functools

import jax
import jax.numpy as jnp
from jax.experimental import pallas as pl
from jax.experimental.pallas import tpu as pltpu

BN_EPS = 1e-5


def _round_up(x, m):
    return (x + m - 1) // m * m


# ----------------------------- Pallas kernel ---------------------------------
def gemm_stats_kernel(p_ref, w_ref, y_ref, stats_ref, *, tile_m, m_total):
    """One M-tile of the im2col GEMM, fused with partial BN statistics.

    p_ref:     (tile_m, K)      bf16  im2col patch rows (zero rows for M pad)
    w_ref:     (K, C_pad)       bf16  conv weight (zero cols for C pad)
    y_ref:     (tile_m, C_pad)  bf16  conv output tile (stored bf16)
    stats_ref: (8, C_pad)       f32   row0 = sum(y), row1 = centered sum-sq
                                      (rows 2..7 left uninitialized)
    """
    y = jnp.dot(p_ref[...], w_ref[...], preferred_element_type=jnp.float32)
    y_ref[...] = y.astype(y_ref.dtype)

    # Number of non-padded rows in this tile (only the last tile may be short).
    i = pl.program_id(0)
    valid = jnp.minimum(tile_m, m_total - i * tile_m)          # int32 scalar

    # Padded rows of y are exactly zero (zero patch rows), so the plain column
    # sum already equals the sum over valid rows.
    s = jnp.sum(y, axis=0, keepdims=True)                      # (1, C_pad)
    mu = s / valid.astype(jnp.float32)                         # per-tile mean

    # Centered sum of squares; mask padded rows (for them (0 - mu)^2 != 0).
    rows = jax.lax.broadcasted_iota(jnp.int32, y.shape, 0)
    d = y - mu
    css = jnp.sum(jnp.where(rows < valid, d * d, 0.0), axis=0, keepdims=True)

    stats_ref[0:1, :] = s
    stats_ref[1:2, :] = css


# ------------------------------- glue ----------------------------------------
def _im2col_bf16(x_nhwc, k, s, p):
    """Return (patches (M, k*k*C_in) bf16, Ho, Wo). Plain-JAX layout plumbing."""
    N, H, W, C = x_nhwc.shape
    xb = x_nhwc.astype(jnp.bfloat16)
    xp = jnp.pad(xb, ((0, 0), (p, p), (p, p), (0, 0)))
    Ho = (H + 2 * p - k) // s + 1
    Wo = (W + 2 * p - k) // s + 1
    cols = []
    for ki in range(k):
        for kj in range(k):
            cols.append(xp[:, ki:ki + Ho * s:s, kj:kj + Wo * s:s, :])  # (N,Ho,Wo,C)
    cols = jnp.stack(cols, axis=3)                      # (N, Ho, Wo, k*k, C)
    return cols.reshape(N * Ho * Wo, k * k * C), Ho, Wo


def conv_block_forward(x_nchw, conv_w, conv_b, bn_gamma, bn_beta,
                       *, k, s=1, p=0, tile_m=512):
    """Forward of ConvBlock: BatchNorm2d(Conv2d(x)), training-mode stats.

    x is NCHW (PyTorch layout). tile_m: im2col rows per grid step (512-1024 on
    v5e/v6e with 128 MiB VMEM, ~512 on v7x); clamped below so the parallel
    grid always has >= 2 steps.
    """
    N, C_in, H, W = x_nchw.shape
    C_out = conv_w.shape[0]

    # Conv bias cancels exactly under training-mode BatchNorm; skip the add.
    del conv_b

    x_nhwc = jnp.transpose(x_nchw, (0, 2, 3, 1))
    patches, Ho, Wo = _im2col_bf16(x_nhwc, k, s, p)      # (M, K) bf16
    M, K = patches.shape

    C_pad = _round_up(C_out, 128)

    # Keep the "parallel" M grid >= 2 steps (megacore / 2 TCs); multiple of 8.
    tile_m = max(8, _round_up(min(tile_m, -(-M // 2)), 8))
    M_pad = _round_up(M, tile_m)
    num_tiles = M_pad // tile_m

    # M padding only (zero rows contribute nothing); K stays unpadded in HBM.
    patches = jnp.pad(patches, ((0, M_pad - M), (0, 0)))
    w_mat = jnp.transpose(conv_w, (2, 3, 1, 0)).reshape(K, C_out)     # (K, C_out)
    w_bf16 = jnp.pad(w_mat, ((0, 0), (0, C_pad - C_out))).astype(jnp.bfloat16)

    # Per-grid-step VMEM budget (everything double-buffered by default).
    block_bytes = (2 * tile_m * K * 2 + 2 * K * C_pad * 2
                   + 2 * tile_m * C_pad * 2 + 2 * 8 * C_pad * 4)
    vmem_limit = int(min(100 * 2**20, max(32 * 2**20, 2 * block_bytes)))

    cost = pl.CostEstimate(
        flops=2 * M_pad * K * C_pad,
        transcendentals=0,
        bytes_accessed=(M_pad * K * 2 + K * C_pad * 2
                        + M_pad * C_pad * 2 + num_tiles * 8 * C_pad * 4))

    kernel = functools.partial(gemm_stats_kernel, tile_m=tile_m, m_total=M)

    # -------- Pass 1: tiled GEMM + fused per-tile partial BN statistics ------
    y_flat, part_stats = pl.pallas_call(
        kernel,
        out_shape=(
            jax.ShapeDtypeStruct((M_pad, C_pad), jnp.bfloat16),
            jax.ShapeDtypeStruct((num_tiles * 8, C_pad), jnp.float32),
        ),
        grid_spec=pl.GridSpec(
            grid=(num_tiles,),
            in_specs=[
                pl.BlockSpec((tile_m, K), lambda i: (i, 0)),
                pl.BlockSpec((K, C_pad), lambda i: (0, 0)),
            ],
            out_specs=(
                pl.BlockSpec((tile_m, C_pad), lambda i: (i, 0)),
                pl.BlockSpec((8, C_pad), lambda i: (i, 0)),
            ),
        ),
        compiler_params=pltpu.CompilerParams(
            dimension_semantics=("parallel",),
            vmem_limit_bytes=vmem_limit),
        cost_estimate=cost,
    )(patches, w_bf16)

    # -------- Finalize: Chan parallel-variance combine, O(num_tiles*C), f32 --
    stats3 = part_stats.reshape(num_tiles, 8, C_pad)
    tile_sum = stats3[:, 0, :C_out]                       # (T, C_out)
    tile_css = stats3[:, 1, :C_out]
    counts = jnp.minimum(tile_m, M - jnp.arange(num_tiles) * tile_m
                         ).astype(jnp.float32)[:, None]   # (T, 1)
    mean = jnp.sum(tile_sum, axis=0) / M
    tile_mean = tile_sum / counts
    var = (jnp.sum(tile_css, axis=0)
           + jnp.sum(counts * (tile_mean - mean) ** 2, axis=0)) / M
    inv_std = jax.lax.rsqrt(var + BN_EPS)
    scale = bn_gamma.astype(jnp.float32) * inv_std        # (C_out,)
    shift = bn_beta.astype(jnp.float32) - mean * scale

    # -------- Epilogue: scale/shift fused by XLA with slice + transpose ------
    out_flat = y_flat[:M, :C_out].astype(jnp.float32) * scale + shift
    out_nhwc = out_flat.reshape(N, Ho, Wo, C_out)
    return jnp.transpose(out_nhwc, (0, 3, 1, 2))          # back to NCHW


# ------------------------------ reference ------------------------------------
def _reference(x_nchw, conv_w, conv_b, bn_gamma, bn_beta, *, k, s, p):
    # Matches the kernel's MXU precision (bf16 operands, f32 accumulation) but
    # keeps the conv output in f32. Includes the conv bias to demonstrate it
    # cancels under training-mode BN.
    y = jax.lax.conv_general_dilated(
        x_nchw.astype(jnp.bfloat16), conv_w.astype(jnp.bfloat16),
        window_strides=(s, s), padding=[(p, p), (p, p)],
        dimension_numbers=("NCHW", "OIHW", "NCHW"),
        preferred_element_type=jnp.float32)
    y = y + conv_b.reshape(1, -1, 1, 1)
    mean = jnp.mean(y, axis=(0, 2, 3), keepdims=True)
    var = jnp.mean((y - mean) ** 2, axis=(0, 2, 3), keepdims=True)
    return (bn_gamma.reshape(1, -1, 1, 1) * (y - mean)
            * jax.lax.rsqrt(var + BN_EPS) + bn_beta.reshape(1, -1, 1, 1))


# -------------------------------- main ----------------------------------------
if __name__ == "__main__":
    N, C_in, H, W = 2, 4, 16, 16
    C_out, k, s, p = 8, 3, 1, 1

    key = jax.random.PRNGKey(0)
    kx, kw, kb = jax.random.split(key, 3)

    x = jax.random.normal(kx, (N, C_in, H, W), jnp.float32)
    fan_in = C_in * k * k
    conv_w = jax.random.normal(kw, (C_out, C_in, k, k), jnp.float32) / jnp.sqrt(fan_in)
    conv_b = jax.random.normal(kb, (C_out,), jnp.float32) * 0.1
    bn_gamma = jnp.ones((C_out,), jnp.float32)   # PyTorch BatchNorm2d defaults
    bn_beta = jnp.zeros((C_out,), jnp.float32)

    fwd = jax.jit(functools.partial(conv_block_forward, k=k, s=s, p=p, tile_m=512))
    out = fwd(x, conv_w, conv_b, bn_gamma, bn_beta)
    out = jax.block_until_ready(out)

    ref = _reference(x, conv_w, conv_b, bn_gamma, bn_beta, k=k, s=s, p=p)
    assert out.shape == (N, C_out, H, W), out.shape
    # Tolerance reflects the bf16 storage of the conv activation (rel err
    # ~2^-9 of |y|); stats themselves are computed from the f32 accumulator.
    max_err = float(jnp.max(jnp.abs(out - ref)))
    assert jnp.allclose(out, ref, atol=2e-2, rtol=2e-2), max_err

    print("KERNEL_OK")
</pallas_src>

<mosaic_0001>
module attributes {stable_mosaic.version = 11 : i64} {
  func.func @gemm_stats_kernel(%arg0: i32, %arg1: memref<256x36xbf16, #tpu.memory_space<vmem>>, %arg2: memref<36x128xbf16, #tpu.memory_space<vmem>>, %arg3: memref<256x128xbf16, #tpu.memory_space<vmem>>, %arg4: memref<8x128xf32, #tpu.memory_space<vmem>>) attributes {dimension_semantics = [#tpu.dimension_semantics<parallel>], iteration_bounds = array<i64: 2>, scalar_prefetch = 0 : i64, scratch_operands = 0 : i64, tpu.core_type = #tpu.core_type<tc>, window_params = [{transform_indices = @transform_0, window_bounds = array<i64: 256, 36>}, {pipeline_mode = #tpu.pipeline_mode<synchronous>, transform_indices = @transform_1, window_bounds = array<i64: 36, 128>}, {transform_indices = @transform_2, window_bounds = array<i64: 256, 128>}, {transform_indices = @transform_3, window_bounds = array<i64: 8, 128>}]} {
    %c0 = arith.constant 0 : index
    %c0_0 = arith.constant 0 : index
    %0 = vector.load %arg1[%c0, %c0_0] : memref<256x36xbf16, #tpu.memory_space<vmem>>, vector<256x36xbf16>
    %c0_1 = arith.constant 0 : index
    %c0_2 = arith.constant 0 : index
    %1 = vector.load %arg2[%c0_1, %c0_2] : memref<36x128xbf16, #tpu.memory_space<vmem>>, vector<36x128xbf16>
    %cst = arith.constant dense<0.000000e+00> : vector<256x128xf32>
    %2 = tpu.matmul %0, %1, %cst {dimension_numbers = #tpu.dot_dimension_numbers<[1], [0], [0], [1], [0, 0, 1, 1], [], []>} : vector<256x36xbf16>, vector<36x128xbf16>, vector<256x128xf32> -> vector<256x128xf32>
    %3 = arith.truncf %2 : vector<256x128xf32> to vector<256x128xbf16>
    %c0_3 = arith.constant 0 : index
    %c0_4 = arith.constant 0 : index
    %4 = vector.load %arg3[%c0_3, %c0_4] : memref<256x128xbf16, #tpu.memory_space<vmem>>, vector<256x128xbf16>
    tpu.vector_store %arg3[%c0_3, %c0_4], %3 {strides = array<i32>} : memref<256x128xbf16, #tpu.memory_space<vmem>>, vector<256x128xbf16>,
    %c256_i32 = arith.constant 256 : i32
    %5 = arith.muli %arg0, %c256_i32 : i32
    %c512_i32 = arith.constant 512 : i32
    %6 = arith.subi %c512_i32, %5 : i32
    %c256_i32_5 = arith.constant 256 : i32
    %7 = arith.minsi %c256_i32_5, %6 : i32
    %cst_6 = arith.constant dense<0.000000e+00> : vector<128xf32>
    %8 = vector.multi_reduction <add>, %2, %cst_6 [0] : vector<256x128xf32> to vector<128xf32>
    %9 = vector.shape_cast %8 : vector<128xf32> to vector<1x128xf32>
    %10 = arith.sitofp %7 : i32 to f32
    %11 = vector.broadcast %10 : f32 to vector<1x128xf32>
    %12 = arith.divf %9, %11 : vector<1x128xf32>
    %13 = tpu.iota {dimensions = array<i32: 0>} : vector<256x128xi32>
    %14 = vector.broadcast %12 : vector<1x128xf32> to vector<256x128xf32>
    %15 = arith.subf %2, %14 : vector<256x128xf32>
    %16 = vector.broadcast %7 : i32 to vector<256x128xi32>
    %17 = arith.cmpi slt, %13, %16 : vector<256x128xi32>
    %18 = arith.mulf %15, %15 : vector<256x128xf32>
    %cst_7 = arith.constant 0.000000e+00 : f32
    %19 = vector.broadcast %cst_7 : f32 to vector<256x128xf32>
    %20 = arith.select %17, %18, %19 : vector<256x128xi1>, vector<256x128xf32>
    %cst_8 = arith.constant dense<0.000000e+00> : vector<128xf32>
    %21 = vector.multi_reduction <add>, %20, %cst_8 [0] : vector<256x128xf32> to vector<128xf32>
    %22 = vector.shape_cast %21 : vector<128xf32> to vector<1x128xf32>
    %c0_9 = arith.constant 0 : index
    %c0_10 = arith.constant 0 : index
    %23 = vector.load %arg4[%c0_9, %c0_10] : memref<8x128xf32, #tpu.memory_space<vmem>>, vector<1x128xf32>
    tpu.vector_store %arg4[%c0_9, %c0_10], %9 {strides = array<i32>} : memref<8x128xf32, #tpu.memory_space<vmem>>, vector<1x128xf32>,
    %c1 = arith.constant 1 : index
    %c0_11 = arith.constant 0 : index
    %24 = vector.load %arg4[%c1, %c0_11] : memref<8x128xf32, #tpu.memory_space<vmem>>, vector<1x128xf32>
    tpu.vector_store %arg4[%c1, %c0_11], %22 {strides = array<i32>} : memref<8x128xf32, #tpu.memory_space<vmem>>, vector<1x128xf32>,
    return
  }
  func.func @transform_0(%arg0: i32) -> (i32, i32) {
    %c0_i32 = arith.constant 0 : i32
    %c0_i32_0 = arith.constant 0 : i32
    return %arg0, %c0_i32 : i32, i32
  }
  func.func @transform_1(%arg0: i32) -> (i32, i32) {
    %c0_i32 = arith.constant 0 : i32
    %c0_i32_0 = arith.constant 0 : i32
    %c0_i32_1 = arith.constant 0 : i32
    return %c0_i32, %c0_i32_0 : i32, i32
  }
  func.func @transform_2(%arg0: i32) -> (i32, i32) {
    %c0_i32 = arith.constant 0 : i32
    %c0_i32_0 = arith.constant 0 : i32
    return %arg0, %c0_i32 : i32, i32
  }
  func.func @transform_3(%arg0: i32) -> (i32, i32) {
    %c0_i32 = arith.constant 0 : i32
    %c0_i32_0 = arith.constant 0 : i32
    return %arg0, %c0_i32 : i32, i32
  }
}

</mosaic_0001>

<llo_original>
// kernel: conv_block_forward.1
$region0: #{conv_block_forward.1}
  #allocation0 [shape = 'u32[]', space=smem, size = 0x4, offset = 0x4, fixed_abs, tag = 'smem constant byte address 0x4 - core index']
  #allocation1 [shape = 'u32[144,128]{1,0:T(1,128)}', space=vmem, size = 0x12000, scoped, tag = 'internal scratch']
  %s0 = inlined_call_operand.vmem [shape: bf16[512,36], index: 0, kind: input, shape index: {}]
  %s1 = inlined_call_operand.vmem [shape: bf16[36,128], index: 1, kind: input, shape index: {}]
  %s2 = inlined_call_operand.vmem [shape: bf16[512,128], index: 2, kind: output, shape index: {0}]
  %s3 = inlined_call_operand.vmem [shape: f32[16,128], index: 3, kind: output, shape index: {1}]
  %4 = xla_tuple %s2, %s3
  %s5 = sld [smem:[#allocation0]]
  $region49: #{conv_block_forward.1} parent=0
    _
  %s7 = ssub.s32 1, %s5
  %s8 = scalar_select 0, %s7, %s5
  loop: start=0, step=1, limit=4
  $region2: #{conv_block_forward.1} parent=0 // loop_pre_header
    _
  $region3: #{conv_block_forward.1} parent=0 // loop_header
    %s10 = sphi 0, %s14
    %p11 = scmp.ge.s32.totalorder %s10, 4
    %s20 = sphi 0, %s22
    %s23 = sphi 0, %s20
    %s24 = sphi 0, %s23
    %s40 = sphi 0, %s24
    %s44 = sphi 0, %s44
    %s46 = sphi 0, %s44
    %s47 = sphi 0, %s46
    %s61 = sphi 0, %s47
    %s67 = sphi 0, %s69
    %s70 = sphi 0, %s67
    %s71 = sphi 0, %s70
    %s87 = sphi 0, %s71
    %s93 = sphi 0, %s95
    %s96 = sphi 0, %s93
    %s97 = sphi 0, %s96
    %s113 = sphi 0, %s97
  $region4: #{conv_block_forward.1} parent=0 // loop_header_branch
    %13 = sbr.rel (%p11) target = $region8
  $region5: #{conv_block_forward.1} parent=0 // loop_body
    %s15 = ssub.s32 %s10, 1
    %s16 = ssub.s32 %s10, 2
    %s17 = sadd.s32 %s10, 1
    %s18 = ssub.s32 %s10, %s17
    %p19 = scmp.eq.s32.totalorder %s18, 0
    %s21 = sadd.s32 %s20, 1
    %s22 = scalar_select %p19, %s20, %s21
    %p25 = pneg %p19
    %p26 = scmp.eq.s32.totalorder %s10, 1
    %p27 = por %p25, %p26
    %p28 = scmp.ne.s32.totalorder %s20, %s23
    %p29 = scmp.eq.s32.totalorder %s10, 0
    %p30 = por %p28, %p29
    %p31 = scmp.ne.s32.totalorder %s20, %s23
    %p32 = scmp.eq.s32.totalorder %s15, 1
    %p33 = por %p31, %p32
    %p34 = scmp.ne.s32.totalorder %s23, %s24
    %p35 = scmp.eq.s32.totalorder %s15, 0
    %p36 = por %p34, %p35
    %p37 = scmp.ne.s32.totalorder %s23, %s24
    %p38 = scmp.eq.s32.totalorder %s16, 1
    %p39 = por %p37, %p38
    %p41 = scmp.ne.s32.totalorder %s24, %s40
    %p42 = scmp.eq.s32.totalorder %s16, 0
    %p43 = por %p41, %p42
    %s45 = sadd.s32 %s44, 1
    %p48 = scmp.eq.s32.totalorder %s10, 1
    %p49 = scmp.ne.s32.totalorder %s44, %s46
    %p50 = scmp.eq.s32.totalorder %s10, 0
    %p51 = por %p49, %p50
    %p52 = scmp.ne.s32.totalorder %s44, %s46
    %p53 = scmp.eq.s32.totalorder %s15, 1
    %p54 = por %p52, %p53
    %p55 = scmp.ne.s32.totalorder %s46, %s47
    %p56 = scmp.eq.s32.totalorder %s15, 0
    %p57 = por %p55, %p56
    %p58 = scmp.ne.s32.totalorder %s46, %s47
    %p59 = scmp.eq.s32.totalorder %s16, 1
    %p60 = por %p58, %p59
    %p62 = scmp.ne.s32.totalorder %s47, %s61
    %p63 = scmp.eq.s32.totalorder %s16, 0
    %p64 = por %p62, %p63
    %s65 = ssub.s32 %s10, %s17
    %p66 = scmp.eq.s32.totalorder %s65, 0
    %s68 = sadd.s32 %s67, 1
    %s69 = scalar_select %p66, %s67, %s68
    %p72 = pneg %p66
    %p73 = scmp.eq.s32.totalorder %s10, 1
    %p74 = por %p72, %p73
    %p75 = scmp.ne.s32.totalorder %s67, %s70
    %p76 = scmp.eq.s32.totalorder %s10, 0
    %p77 = por %p75, %p76
    %p78 = scmp.ne.s32.totalorder %s67, %s70
    %p79 = scmp.eq.s32.totalorder %s15, 1
    %p80 = por %p78, %p79
    %p81 = scmp.ne.s32.totalorder %s70, %s71
    %p82 = scmp.eq.s32.totalorder %s15, 0
    %p83 = por %p81, %p82
    %p84 = scmp.ne.s32.totalorder %s70, %s71
    %p85 = scmp.eq.s32.totalorder %s16, 1
    %p86 = por %p84, %p85
    %p88 = scmp.ne.s32.totalorder %s71, %s87
    %p89 = scmp.eq.s32.totalorder %s16, 0
    %p90 = por %p88, %p89
    %s91 = ssub.s32 %s10, %s17
    %p92 = scmp.eq.s32.totalorder %s91, 0
    %s94 = sadd.s32 %s93, 1
    %s95 = scalar_select %p92, %s93, %s94
    %p98 = pneg %p92
    %p99 = scmp.eq.s32.totalorder %s10, 1
    %p100 = por %p98, %p99
    %p101 = scmp.ne.s32.totalorder %s93, %s96
    %p102 = scmp.eq.s32.totalorder %s10, 0
    %p103 = por %p101, %p102
    %p104 = scmp.ne.s32.totalorder %s93, %s96
    %p105 = scmp.eq.s32.totalorder %s15, 1
    %p106 = por %p104, %p105
    %p107 = scmp.ne.s32.totalorder %s96, %s97
    %p108 = scmp.eq.s32.totalorder %s15, 0
    %p109 = por %p107, %p108
    %p110 = scmp.ne.s32.totalorder %s96, %s97
    %p111 = scmp.eq.s32.totalorder %s16, 1
    %p112 = por %p110, %p111
    %p114 = scmp.ne.s32.totalorder %s97, %s113
    %p115 = scmp.eq.s32.totalorder %s16, 0
    %p116 = por %p114, %p115
    %p117 = scmp.le.s32.totalorder 1, %s10
    %p118 = scmp.lt.s32.totalorder %s10, 3
    %p119 = pnand %p117, %p118
    %p120 = pneg %p119
    // Predicated region
    $region9: #{conv_block_forward.1} parent=5 // pred_check
      _
    $region10: #{conv_block_forward.1} parent=5 // pred_check_branch
      %122 = sbr.rel (%p119) target = $region12
    $region11: #{conv_block_forward.1} parent=5 // pred_region
      %s123 = ssub.s32 %s10, 1
      // Predicated region
      $region13: #{conv_block_forward.1} parent=11 // pred_check
        %p124 = pneg %p57
      $region14: #{conv_block_forward.1} parent=11 // pred_check_branch
        %126 = sbr.rel (%p124) target = $region16
      $region15: #{conv_block_forward.1} parent=11 // pred_region
        _
      $region16: #{conv_block_forward.1} parent=11 // pred_fallthru
        _
    $region12: #{conv_block_forward.1} parent=5 // pred_fallthru
      _
    %p127 = scmp.lt.s32.totalorder %s10, 2
    // Predicated region
    $region17: #{conv_block_forward.1} parent=5 // pred_check
      %p128 = pneg %p127
    $region18: #{conv_block_forward.1} parent=5 // pred_check_branch
      %130 = sbr.rel (%p128) target = $region20
    $region19: #{conv_block_forward.1} parent=5 // pred_region
      // Predicated region
      $region21: #{conv_block_forward.1} parent=19 // pred_check
        %p131 = pneg %p30
      $region22: #{conv_block_forward.1} parent=19 // pred_check_branch
        %133 = sbr.rel (%p131) target = $region24
      $region23: #{conv_block_forward.1} parent=19 // pred_region
        %s134 = smul.u32 32, %s10
        %p135 = scmp.lt.s32.totalorder %s134, 63
        %s136 = scalar_select %p135, %s134, 63
        %s137 = smul.addr %s136, 4
        %s138 = scalar_lea.vmem %s0, %s137
        %s139 = smul.u32 32, %s10
      $region24: #{conv_block_forward.1} parent=19 // pred_fallthru
        _
    $region20: #{conv_block_forward.1} parent=5 // pred_fallthru
      _
    %p140 = scmp.le.s32.totalorder 1, %s10
    %p141 = scmp.lt.s32.totalorder %s10, 3
    %p142 = pnand %p140, %p141
    %p143 = pneg %p142
    // Predicated region
    $region25: #{conv_block_forward.1} parent=5 // pred_check
      _
    $region26: #{conv_block_forward.1} parent=5 // pred_check_branch
      %145 = sbr.rel (%p142) target = $region28
    $region27: #{conv_block_forward.1} parent=5 // pred_region
      %s146 = ssub.s32 %s10, 1
      %s147 = smul.u32 32, %s15
      %p148 = scmp.lt.s32.totalorder %s147, 63
      %s149 = scalar_select %p148, %s147, 63
      %s150 = smul.addr %s149, 4
      %s151 = scalar_lea.vmem %s0, %s150
      %p152 = pneg %p36
      %p153 = pneg %p33
      %p154 = pneg %p57
      %p155 = pneg %p54
      %p156 = pneg %p83
      %p157 = pneg %p80
      %s158 = smul.u32 32, %s15
      %p159 = scmp.lt.s32.totalorder %s158, 63
      %s160 = scalar_select %p159, %s158, 63
      %s161 = smul.addr %s160, 4
      %s162 = scalar_lea.vmem %s2, %s161
      %p163 = pneg %p109
      %p164 = pneg %p106
      %p165 = scmp.lt.s32.totalorder %s15, 1
      %s166 = scalar_select %p165, %s15, 1
      %s167 = smul.addr %s166, 8
      %s168 = scalar_lea.vmem %s3, %s167
      %s169 = smul.u32 32, %s15
      %p170 = scmp.lt.s32.totalorder %s169, 63
      %s171 = scalar_select %p170, %s169, 63
      %s172 = smul.addr %s171, 4
      %s173 = scalar_lea.vmem %s0, %s172
      %s174 = smul.u32 32, %s15
      %s175 = smul.u32 32, %s15
      %p176 = scmp.lt.s32.totalorder %s175, 63
      %s177 = scalar_select %p176, %s175, 63
      %s178 = smul.addr %s177, 4
      %s179 = scalar_lea.vmem %s2, %s178
      %s180 = smul.u32 32, %s15
      %p181 = scmp.lt.s32.totalorder %s15, 1
      %s182 = scalar_select %p181, %s15, 1
      %s183 = smul.addr %s182, 8
      %s184 = scalar_lea.vmem %s3, %s183
      %v186 = vld [vmem:[%s173] sm:$0xf]
      %v187 = vld [vmem:[%s173 + $0x4] sm:$0xf]
      %v188 = vld [vmem:[%s173 + $0x8] sm:$0xf]
      %v189 = vld [vmem:[%s173 + $0xc] sm:$0xf]
      %v190 = vld [vmem:[%s173 + $0x10] sm:$0xf]
      %v191 = vld [vmem:[%s173 + $0x14] sm:$0xf]
      %v192 = vld [vmem:[%s173 + $0x18] sm:$0xf]
      %v193 = vld [vmem:[%s173 + $0x1c] sm:$0xf]
      %v194 = vld [vmem:[%s173 + $0x20] sm:$0xf]
      %v195 = vld [vmem:[%s173 + $0x24] sm:$0xf]
      %v196 = vld [vmem:[%s173 + $0x28] sm:$0xf]
      %v197 = vld [vmem:[%s173 + $0x2c] sm:$0xf]
      %v198 = vld [vmem:[%s173 + $0x30] sm:$0xf]
      %v199 = vld [vmem:[%s173 + $0x34] sm:$0xf]
      %v200 = vld [vmem:[%s173 + $0x38] sm:$0xf]
      %v201 = vld [vmem:[%s173 + $0x3c] sm:$0xf]
      %v202 = vld [vmem:[%s173 + $0x40] sm:$0xf]
      %v203 = vld [vmem:[%s173 + $0x44] sm:$0xf]
      %v204 = vld [vmem:[%s173 + $0x48] sm:$0xf]
      %v205 = vld [vmem:[%s173 + $0x4c] sm:$0xf]
      %v206 = vld [vmem:[%s173 + $0x50] sm:$0xf]
      %v207 = vld [vmem:[%s173 + $0x54] sm:$0xf]
      %v208 = vld [vmem:[%s173 + $0x58] sm:$0xf]
      %v209 = vld [vmem:[%s173 + $0x5c] sm:$0xf]
      %v210 = vld [vmem:[%s173 + $0x60] sm:$0xf]
      %v211 = vld [vmem:[%s173 + $0x64] sm:$0xf]
      %v212 = vld [vmem:[%s173 + $0x68] sm:$0xf]
      %v213 = vld [vmem:[%s173 + $0x6c] sm:$0xf]
      %v214 = vld [vmem:[%s173 + $0x70] sm:$0xf]
      %v215 = vld [vmem:[%s173 + $0x74] sm:$0xf]
      %v216 = vld [vmem:[%s173 + $0x78] sm:$0xf]
      %v217 = vld [vmem:[%s173 + $0x7c] sm:$0xf]
      %v218 = vld [vmem:[%s1] sm:$0xf]
      %v219 = vld [vmem:[%s1 + $0x4] sm:$0xf]
      %v220 = vld [vmem:[%s1 + $0x8] sm:$0xf]
      %v221 = vld [vmem:[%s1 + $0xc] sm:$0xf]
      %v222 = vld [vmem:[%s1 + $0x10] sm:$0x3]
      %v255 = vunpack.c.l.b16 %v186
      %v256 = vunpack.c.l.b16 %v187
      %v257 = vunpack.c.l.b16 %v188
      %v258 = vunpack.c.l.b16 %v189
      %v259 = vunpack.c.l.b16 %v190
      %v260 = vunpack.c.l.b16 %v191
      %v261 = vunpack.c.l.b16 %v192
      %v262 = vunpack.c.l.b16 %v193
      %v263 = vunpack.c.l.b16 %v194
      %v264 = vunpack.c.l.b16 %v195
      %v265 = vunpack.c.l.b16 %v196
      %v266 = vunpack.c.l.b16 %v197
      %v267 = vunpack.c.l.b16 %v198
      %v268 = vunpack.c.l.b16 %v199
      %v269 = vunpack.c.l.b16 %v200
      %v270 = vunpack.c.l.b16 %v201
      %v271 = vunpack.c.l.b16 %v202
      %v272 = vunpack.c.l.b16 %v203
      %v273 = vunpack.c.l.b16 %v204
      %v274 = vunpack.c.l.b16 %v205
      %v275 = vunpack.c.l.b16 %v206
      %v276 = vunpack.c.l.b16 %v207
      %v277 = vunpack.c.l.b16 %v208
      %v278 = vunpack.c.l.b16 %v209
      %v279 = vunpack.c.l.b16 %v210
      %v280 = vunpack.c.l.b16 %v211
      %v281 = vunpack.c.l.b16 %v212
      %v282 = vunpack.c.l.b16 %v213
      %v283 = vunpack.c.l.b16 %v214
      %v284 = vunpack.c.l.b16 %v215
      %v285 = vunpack.c.l.b16 %v216
      %v286 = vunpack.c.l.b16 %v217
      %v287 = vpack.c.b16 %v256, %v255
      %v288 = vpack.c.b16 %v258, %v257
      %v289 = vpack.c.b16 %v260, %v259
      %v290 = vpack.c.b16 %v262, %v261
      %v291 = vpack.c.b16 %v264, %v263
      %v292 = vpack.c.b16 %v266, %v265
      %v293 = vpack.c.b16 %v268, %v267
      %v294 = vpack.c.b16 %v270, %v269
      %v295 = vpack.c.b16 %v272, %v271
      %v296 = vpack.c.b16 %v274, %v273
      %v297 = vpack.c.b16 %v276, %v275
      %v298 = vpack.c.b16 %v278, %v277
      %v299 = vpack.c.b16 %v280, %v279
      %v300 = vpack.c.b16 %v282, %v281
      %v301 = vpack.c.b16 %v284, %v283
      %v302 = vpack.c.b16 %v286, %v285
      %v308 = vunpack.c.l.b16 %v218
      %v309 = vunpack.c.l.b16 %v219
      %v310 = vunpack.c.l.b16 %v220
      %v311 = vunpack.c.l.b16 %v221
      %v312 = vunpack.c.l.b16 %v222
      %v313 = vpack.c.b16 %v309, %v308
      %v314 = vpack.c.b16 %v311, %v310
      %v315 = vpack.c.b16 %v312, %v312
      %vm318 = vcmask 293888
      %v320 = vsel %vm318, %v287, 0
      %v323 = vsel %vm318, %v288, 0
      %v326 = vsel %vm318, %v289, 0
      %v329 = vsel %vm318, %v290, 0
      %v332 = vsel %vm318, %v291, 0
      %v335 = vsel %vm318, %v292, 0
      %v338 = vsel %vm318, %v293, 0
      %v341 = vsel %vm318, %v294, 0
      %v344 = vsel %vm318, %v295, 0
      %v347 = vsel %vm318, %v296, 0
      %v350 = vsel %vm318, %v297, 0
      %v353 = vsel %vm318, %v298, 0
      %v356 = vsel %vm318, %v299, 0
      %v359 = vsel %vm318, %v300, 0
      %v362 = vsel %vm318, %v301, 0
      %v365 = vsel %vm318, %v302, 0
      %vm367 = vcmask 1041408
      %v369 = vsel %vm367, %v315, 0
      %371 = vmatprep.subr.bf16.mxu0 0
      %372 = vmatpush1.bf16.msra.mxu0 0
      %373 = vmatprep.subr.bf16.mxu0 0
      %374 = vmatpush1.bf16.msra.mxu0 0
      %375 = vmatprep.subr.bf16.mxu0 0
      %376 = vmatpush1.bf16.msra.mxu0 0
      %377 = vmatprep.subr.bf16.mxu0 0
      %378 = vmatpush1.bf16.msra.mxu0 0
      %379 = vmatprep.subr.bf16.mxu0 0
      %380 = vmatpush1.bf16.msra.mxu0 0
      %381 = vmatprep.subr.bf16.mxu0 0
      %382 = vmatpush1.bf16.msra.mxu0 %v369
      %383 = vmatprep.subr.bf16.mxu0 0
      %384 = vmatpush1.bf16.msra.mxu0 %v314
      %385 = vmatprep.subr.bf16.mxu0 0
      %386 = vmatpush1.bf16.msra.mxu0 %v313
      %387 = vmatprep.subr.bf16.mxu0 0
      %388 = vmatpush2.bf16.msra.mxu0 0
      %389 = vmatprep.subr.bf16.mxu0 0
      %390 = vmatpush2.bf16.msra.mxu0 0
      %391 = vmatprep.subr.bf16.mxu0 0
      %392 = vmatpush2.bf16.msra.mxu0 0
      %393 = vmatprep.subr.bf16.mxu0 0
      %394 = vmatpush2.bf16.msra.mxu0 0
      %395 = vmatprep.subr.bf16.mxu0 0
      %396 = vmatpush2.bf16.msra.mxu0 0
      %397 = vmatprep.subr.bf16.mxu0 0
      %398 = vmatpush2.bf16.msra.mxu0 0
      %399 = vmatprep.subr.bf16.mxu0 0
      %400 = vmatpush2.bf16.msra.mxu0 0
      %401 = vmatprep.subr.bf16.mxu0 0
      %402 = vmatpush2.bf16.msra.mxu0 0
      %403 = vmatprep.mubr.bf16.mxu0 0
      %404 = vmatmul.mubr.bf16.gmra.mxu0 %v320
      %v405 = vpop.f32.mrf.mxu0
      %v406 = vadd.f32 0.0, %v405
      %v407 = vpop.f32.mrf.mxu0
      %v408 = vpop.f32.mrf.mxu0
      %v409 = vadd.f32 0.0, %v408
      %v410 = vpop.f32.mrf.mxu0
      %411 = vmatprep.mubr.bf16.mxu0 0
      %412 = vmatmul.mubr.bf16.gmra.mxu0 %v323
      %v413 = vpop.f32.mrf.mxu0
      %v414 = vadd.f32 0.0, %v413
      %v415 = vpop.f32.mrf.mxu0
      %v416 = vpop.f32.mrf.mxu0
      %v417 = vadd.f32 0.0, %v416
      %v418 = vpop.f32.mrf.mxu0
      %419 = vmatprep.mubr.bf16.mxu0 0
      %420 = vmatmul.mubr.bf16.gmra.mxu0 %v326
      %v421 = vpop.f32.mrf.mxu0
      %v422 = vadd.f32 0.0, %v421
      %v423 = vpop.f32.mrf.mxu0
      %v424 = vpop.f32.mrf.mxu0
      %v425 = vadd.f32 0.0, %v424
      %v426 = vpop.f32.mrf.mxu0
      %427 = vmatprep.mubr.bf16.mxu0 0
      %428 = vmatmul.mubr.bf16.gmra.mxu0 %v329
      %v429 = vpop.f32.mrf.mxu0
      %v430 = vadd.f32 0.0, %v429
      %v431 = vpop.f32.mrf.mxu0
      %v432 = vpop.f32.mrf.mxu0
      %v433 = vadd.f32 0.0, %v432
      %v434 = vpop.f32.mrf.mxu0
      %435 = vmatprep.mubr.bf16.mxu0 0
      %436 = vmatmul.mubr.bf16.gmra.mxu0 %v332
      %v437 = vpop.f32.mrf.mxu0
      %v438 = vadd.f32 0.0, %v437
      %v439 = vpop.f32.mrf.mxu0
      %v440 = vpop.f32.mrf.mxu0
      %v441 = vadd.f32 0.0, %v440
      %v442 = vpop.f32.mrf.mxu0
      %443 = vmatprep.mubr.bf16.mxu0 0
      %444 = vmatmul.mubr.bf16.gmra.mxu0 %v335
      %v445 = vpop.f32.mrf.mxu0
      %v446 = vadd.f32 0.0, %v445
      %v447 = vpop.f32.mrf.mxu0
      %v448 = vpop.f32.mrf.mxu0
      %v449 = vadd.f32 0.0, %v448
      %v450 = vpop.f32.mrf.mxu0
      %451 = vmatprep.mubr.bf16.mxu0 0
      %452 = vmatmul.mubr.bf16.gmra.mxu0 %v338
      %v453 = vpop.f32.mrf.mxu0
      %v454 = vadd.f32 0.0, %v453
      %v455 = vpop.f32.mrf.mxu0
      %v456 = vpop.f32.mrf.mxu0
      %v457 = vadd.f32 0.0, %v456
      %v458 = vpop.f32.mrf.mxu0
      %459 = vmatprep.mubr.bf16.mxu0 0
      %460 = vmatmul.mubr.bf16.gmra.mxu0 %v341
      %v461 = vpop.f32.mrf.mxu0
      %v462 = vadd.f32 0.0, %v461
      %v463 = vpop.f32.mrf.mxu0
      %v464 = vpop.f32.mrf.mxu0
      %v465 = vadd.f32 0.0, %v464
      %v466 = vpop.f32.mrf.mxu0
      %467 = vmatprep.mubr.bf16.mxu0 0
      %468 = vmatmul.mubr.bf16.gmra.mxu0 %v344
      %v469 = vpop.f32.mrf.mxu0
      %v470 = vadd.f32 0.0, %v469
      %v471 = vpop.f32.mrf.mxu0
      %v472 = vpop.f32.mrf.mxu0
      %v473 = vadd.f32 0.0, %v472
      %v474 = vpop.f32.mrf.mxu0
      %475 = vmatprep.mubr.bf16.mxu0 0
      %476 = vmatmul.mubr.bf16.gmra.mxu0 %v347
      %v477 = vpop.f32.mrf.mxu0
      %v478 = vadd.f32 0.0, %v477
      %v479 = vpop.f32.mrf.mxu0
      %v480 = vpop.f32.mrf.mxu0
      %v481 = vadd.f32 0.0, %v480
      %v482 = vpop.f32.mrf.mxu0
      %483 = vmatprep.mubr.bf16.mxu0 0
      %484 = vmatmul.mubr.bf16.gmra.mxu0 %v350
      %v485 = vpop.f32.mrf.mxu0
      %v486 = vadd.f32 0.0, %v485
      %v487 = vpop.f32.mrf.mxu0
      %v488 = vpop.f32.mrf.mxu0
      %v489 = vadd.f32 0.0, %v488
      %v490 = vpop.f32.mrf.mxu0
      %491 = vmatprep.mubr.bf16.mxu0 0
      %492 = vmatmul.mubr.bf16.gmra.mxu0 %v353
      %v493 = vpop.f32.mrf.mxu0
      %v494 = vadd.f32 0.0, %v493
      %v495 = vpop.f32.mrf.mxu0
      %v496 = vpop.f32.mrf.mxu0
      %v497 = vadd.f32 0.0, %v496
      %v498 = vpop.f32.mrf.mxu0
      %499 = vmatprep.mubr.bf16.mxu0 0
      %500 = vmatmul.mubr.bf16.gmra.mxu0 %v356
      %v501 = vpop.f32.mrf.mxu0
      %v502 = vadd.f32 0.0, %v501
      %v503 = vpop.f32.mrf.mxu0
      %v504 = vpop.f32.mrf.mxu0
      %v505 = vadd.f32 0.0, %v504
      %v506 = vpop.f32.mrf.mxu0
      %507 = vmatprep.mubr.bf16.mxu0 0
      %508 = vmatmul.mubr.bf16.gmra.mxu0 %v359
      %v509 = vpop.f32.mrf.mxu0
      %v510 = vadd.f32 0.0, %v509
      %v511 = vpop.f32.mrf.mxu0
      %v512 = vpop.f32.mrf.mxu0
      %v513 = vadd.f32 0.0, %v512
      %v514 = vpop.f32.mrf.mxu0
      %515 = vmatprep.mubr.bf16.mxu0 0
      %516 = vmatmul.mubr.bf16.gmra.mxu0 %v362
      %v517 = vpop.f32.mrf.mxu0
      %v518 = vadd.f32 0.0, %v517
      %v519 = vpop.f32.mrf.mxu0
      %v520 = vpop.f32.mrf.mxu0
      %v521 = vadd.f32 0.0, %v520
      %v522 = vpop.f32.mrf.mxu0
      %523 = vmatprep.mubr.bf16.mxu0 0
      %524 = vmatmul.mubr.bf16.gmra.mxu0 %v365
      %v525 = vpop.f32.mrf.mxu0
      %v526 = vadd.f32 0.0, %v525
      %v527 = vpop.f32.mrf.mxu0
      %v528 = vpop.f32.mrf.mxu0
      %v529 = vadd.f32 0.0, %v528
      %v530 = vpop.f32.mrf.mxu0
      %531 = vdwg.mxu0
      %v532 = vpack.c.bf16 %v409, %v406
      %v533 = vpack.c.bf16 %v417, %v414
      %v534 = vpack.c.bf16 %v425, %v422
      %v535 = vpack.c.bf16 %v433, %v430
      %v536 = vpack.c.bf16 %v441, %v438
      %v537 = vpack.c.bf16 %v449, %v446
      %v538 = vpack.c.bf16 %v457, %v454
      %v539 = vpack.c.bf16 %v465, %v462
      %v540 = vpack.c.bf16 %v473, %v470
      %v541 = vpack.c.bf16 %v481, %v478
      %v542 = vpack.c.bf16 %v489, %v486
      %v543 = vpack.c.bf16 %v497, %v494
      %v544 = vpack.c.bf16 %v505, %v502
      %v545 = vpack.c.bf16 %v513, %v510
      %v546 = vpack.c.bf16 %v521, %v518
      %v547 = vpack.c.bf16 %v529, %v526
      %v564 = vunpack.c.l.b16 %v532
      %v565 = vunpack.c.h.b16 %v532
      %v566 = vunpack.c.l.b16 %v533
      %v567 = vunpack.c.h.b16 %v533
      %v568 = vunpack.c.l.b16 %v534
      %v569 = vunpack.c.h.b16 %v534
      %v570 = vunpack.c.l.b16 %v535
      %v571 = vunpack.c.h.b16 %v535
      %v572 = vunpack.c.l.b16 %v536
      %v573 = vunpack.c.h.b16 %v536
      %v574 = vunpack.c.l.b16 %v537
      %v575 = vunpack.c.h.b16 %v537
      %v576 = vunpack.c.l.b16 %v538
      %v577 = vunpack.c.h.b16 %v538
      %v578 = vunpack.c.l.b16 %v539
      %v579 = vunpack.c.h.b16 %v539
      %v580 = vunpack.c.l.b16 %v540
      %v581 = vunpack.c.h.b16 %v540
      %v582 = vunpack.c.l.b16 %v541
      %v583 = vunpack.c.h.b16 %v541
      %v584 = vunpack.c.l.b16 %v542
      %v585 = vunpack.c.h.b16 %v542
      %v586 = vunpack.c.l.b16 %v543
      %v587 = vunpack.c.h.b16 %v543
      %v588 = vunpack.c.l.b16 %v544
      %v589 = vunpack.c.h.b16 %v544
      %v590 = vunpack.c.l.b16 %v545
      %v591 = vunpack.c.h.b16 %v545
      %v592 = vunpack.c.l.b16 %v546
      %v593 = vunpack.c.h.b16 %v546
      %v594 = vunpack.c.l.b16 %v547
      %v595 = vunpack.c.h.b16 %v547
      %v596 = vpack.c.b16 %v564, %v564
      %v597 = vpack.c.b16 %v565, %v565
      %v598 = vpack.c.b16 %v566, %v566
      %v599 = vpack.c.b16 %v567, %v567
      %v600 = vpack.c.b16 %v568, %v568
      %v601 = vpack.c.b16 %v569, %v569
      %v602 = vpack.c.b16 %v570, %v570
      %v603 = vpack.c.b16 %v571, %v571
      %v604 = vpack.c.b16 %v572, %v572
      %v605 = vpack.c.b16 %v573, %v573
      %v606 = vpack.c.b16 %v574, %v574
      %v607 = vpack.c.b16 %v575, %v575
      %v608 = vpack.c.b16 %v576, %v576
      %v609 = vpack.c.b16 %v577, %v577
      %v610 = vpack.c.b16 %v578, %v578
      %v611 = vpack.c.b16 %v579, %v579
      %v612 = vpack.c.b16 %v580, %v580
      %v613 = vpack.c.b16 %v581, %v581
      %v614 = vpack.c.b16 %v582, %v582
      %v615 = vpack.c.b16 %v583, %v583
      %v616 = vpack.c.b16 %v584, %v584
      %v617 = vpack.c.b16 %v585, %v585
      %v618 = vpack.c.b16 %v586, %v586
      %v619 = vpack.c.b16 %v587, %v587
      %v620 = vpack.c.b16 %v588, %v588
      %v621 = vpack.c.b16 %v589, %v589
      %v622 = vpack.c.b16 %v590, %v590
      %v623 = vpack.c.b16 %v591, %v591
      %v624 = vpack.c.b16 %v592, %v592
      %v625 = vpack.c.b16 %v593, %v593
      %v626 = vpack.c.b16 %v594, %v594
      %v627 = vpack.c.b16 %v595, %v595
      %660 = vst [vmem:[%s179] sm:$0xf] %v596
      %661 = vst [vmem:[%s179 + $0x4] sm:$0xf] %v597
      %662 = vst [vmem:[%s179 + $0x8] sm:$0xf] %v598
      %663 = vst [vmem:[%s179 + $0xc] sm:$0xf] %v599
      %664 = vst [vmem:[%s179 + $0x10] sm:$0xf] %v600
      %665 = vst [vmem:[%s179 + $0x14] sm:$0xf] %v601
      %666 = vst [vmem:[%s179 + $0x18] sm:$0xf] %v602
      %667 = vst [vmem:[%s179 + $0x1c] sm:$0xf] %v603
      %668 = vst [vmem:[%s179 + $0x20] sm:$0xf] %v604
      %669 = vst [vmem:[%s179 + $0x24] sm:$0xf] %v605
      %670 = vst [vmem:[%s179 + $0x28] sm:$0xf] %v606
      %671 = vst [vmem:[%s179 + $0x2c] sm:$0xf] %v607
      %672 = vst [vmem:[%s179 + $0x30] sm:$0xf] %v608
      %673 = vst [vmem:[%s179 + $0x34] sm:$0xf] %v609
      %674 = vst [vmem:[%s179 + $0x38] sm:$0xf] %v610
      %675 = vst [vmem:[%s179 + $0x3c] sm:$0xf] %v611
      %676 = vst [vmem:[%s179 + $0x40] sm:$0xf] %v612
      %677 = vst [vmem:[%s179 + $0x44] sm:$0xf] %v613
      %678 = vst [vmem:[%s179 + $0x48] sm:$0xf] %v614
      %679 = vst [vmem:[%s179 + $0x4c] sm:$0xf] %v615
      %680 = vst [vmem:[%s179 + $0x50] sm:$0xf] %v616
      %681 = vst [vmem:[%s179 + $0x54] sm:$0xf] %v617
      %682 = vst [vmem:[%s179 + $0x58] sm:$0xf] %v618
      %683 = vst [vmem:[%s179 + $0x5c] sm:$0xf] %v619
      %684 = vst [vmem:[%s179 + $0x60] sm:$0xf] %v620
      %685 = vst [vmem:[%s179 + $0x64] sm:$0xf] %v621
      %686 = vst [vmem:[%s179 + $0x68] sm:$0xf] %v622
      %687 = vst [vmem:[%s179 + $0x6c] sm:$0xf] %v623
      %688 = vst [vmem:[%s179 + $0x70] sm:$0xf] %v624
      %689 = vst [vmem:[%s179 + $0x74] sm:$0xf] %v625
      %690 = vst [vmem:[%s179 + $0x78] sm:$0xf] %v626
      %691 = vst [vmem:[%s179 + $0x7c] sm:$0xf] %v627
      %s692 = smul.u32 %s15, 256
      %s693 = ssub.s32 512, %s692
      %p694 = scmp.lt.s32.totalorder %s693, 256
      %s695 = scalar_select %p694, %s693, 256
      %v696 = vadd.f32 %v406, %v409
      %v697 = vadd.f32 %v696, %v414
      %v698 = vadd.f32 %v697, %v417
      %v699 = vadd.f32 %v698, %v422
      %v700 = vadd.f32 %v699, %v425
      %v701 = vadd.f32 %v700, %v430
      %v702 = vadd.f32 %v701, %v433
      %v703 = vadd.f32 %v702, %v438
      %v704 = vadd.f32 %v703, %v441
      %v705 = vadd.f32 %v704, %v446
      %v706 = vadd.f32 %v705, %v449
      %v707 = vadd.f32 %v706, %v454
      %v708 = vadd.f32 %v707, %v457
      %v709 = vadd.f32 %v708, %v462
      %v710 = vadd.f32 %v709, %v465
      %v711 = vadd.f32 %v710, %v470
      %v712 = vadd.f32 %v711, %v473
      %v713 = vadd.f32 %v712, %v478
      %v714 = vadd.f32 %v713, %v481
      %v715 = vadd.f32 %v714, %v486
      %v716 = vadd.f32 %v715, %v489
      %v717 = vadd.f32 %v716, %v494
      %v718 = vadd.f32 %v717, %v497
      %v719 = vadd.f32 %v718, %v502
      %v720 = vadd.f32 %v719, %v505
      %v721 = vadd.f32 %v720, %v510
      %v722 = vadd.f32 %v721, %v513
      %v723 = vadd.f32 %v722, %v518
      %v724 = vadd.f32 %v723, %v521
      %v725 = vadd.f32 %v724, %v526
      %v726 = vadd.f32 %v725, %v529
      %v727 = vrot.slane %v726, 4
      %v728 = vadd.f32 %v726, %v727
      %v729 = vrot.slane %v728, 2
      %v730 = vadd.f32 %v728, %v729
      %v731 = vrot.slane %v730, 1
      %v732 = vadd.f32 %v730, %v731
      %s733 = scvt.s32.f32 %s695
      %v734 = vstv %s733
      %v735 = vrcp.pop %v734
      %v736 = vmul.f32 %v732, %v735
      %v737 = vlaneseq
      %v738 = vshrl.u32 %v737, 7
      %v739 = vadd.s32 %v738, 8
      %v740 = vadd.s32 %v738, 16
      %v741 = vadd.s32 %v738, 24
      %v742 = vadd.s32 %v738, 32
      %v743 = vadd.s32 %v738, 40
      %v744 = vadd.s32 %v738, 48
      %v745 = vadd.s32 %v738, 56
      %v746 = vadd.s32 %v738, 64
      %v747 = vadd.s32 %v738, 72
      %v748 = vadd.s32 %v738, 80
      %v749 = vadd.s32 %v738, 88
      %v750 = vadd.s32 %v738, 96
      %v751 = vadd.s32 %v738, 104
      %v752 = vadd.s32 %v738, 112
      %v753 = vadd.s32 %v738, 120
      %v754 = vadd.s32 %v738, 128
      %v755 = vadd.s32 %v738, 136
      %v756 = vadd.s32 %v738, 144
      %v757 = vadd.s32 %v738, 152
      %v758 = vadd.s32 %v738, 160
      %v759 = vadd.s32 %v738, 168
      %v760 = vadd.s32 %v738, 176
      %v761 = vadd.s32 %v738, 184
      %v762 = vadd.s32 %v738, 192
      %v763 = vadd.s32 %v738, 200
      %v764 = vadd.s32 %v738, 208
      %v765 = vadd.s32 %v738, 216
      %v766 = vadd.s32 %v738, 224
      %v767 = vadd.s32 %v738, 232
      %v768 = vadd.s32 %v738, 240
      %v769 = vadd.s32 %v738, 248
      %v770 = vsub.f32 %v406, %v736
      %v771 = vsub.f32 %v409, %v736
      %v772 = vsub.f32 %v414, %v736
      %v773 = vsub.f32 %v417, %v736
      %v774 = vsub.f32 %v422, %v736
      %v775 = vsub.f32 %v425, %v736
      %v776 = vsub.f32 %v430, %v736
      %v777 = vsub.f32 %v433, %v736
      %v778 = vsub.f32 %v438, %v736
      %v779 = vsub.f32 %v441, %v736
      %v780 = vsub.f32 %v446, %v736
      %v781 = vsub.f32 %v449, %v736
      %v782 = vsub.f32 %v454, %v736
      %v783 = vsub.f32 %v457, %v736
      %v784 = vsub.f32 %v462, %v736
      %v785 = vsub.f32 %v465, %v736
      %v786 = vsub.f32 %v470, %v736
      %v787 = vsub.f32 %v473, %v736
      %v788 = vsub.f32 %v478, %v736
      %v789 = vsub.f32 %v481, %v736
      %v790 = vsub.f32 %v486, %v736
      %v791 = vsub.f32 %v489, %v736
      %v792 = vsub.f32 %v494, %v736
      %v793 = vsub.f32 %v497, %v736
      %v794 = vsub.f32 %v502, %v736
      %v795 = vsub.f32 %v505, %v736
      %v796 = vsub.f32 %v510, %v736
      %v797 = vsub.f32 %v513, %v736
      %v798 = vsub.f32 %v518, %v736
      %v799 = vsub.f32 %v521, %v736
      %v800 = vsub.f32 %v526, %v736
      %v801 = vsub.f32 %v529, %v736
      %v802 = vstv %s695
      %vm803 = vcmp.lt.s32.totalorder %v738, %v802
      %vm804 = vcmp.lt.s32.totalorder %v739, %v802
      %vm805 = vcmp.lt.s32.totalorder %v740, %v802
      %vm806 = vcmp.lt.s32.totalorder %v741, %v802
      %vm807 = vcmp.lt.s32.totalorder %v742, %v802
      %vm808 = vcmp.lt.s32.totalorder %v743, %v802
      %vm809 = vcmp.lt.s32.totalorder %v744, %v802
      %vm810 = vcmp.lt.s32.totalorder %v745, %v802
      %vm811 = vcmp.lt.s32.totalorder %v746, %v802
      %vm812 = vcmp.lt.s32.totalorder %v747, %v802
      %vm813 = vcmp.lt.s32.totalorder %v748, %v802
      %vm814 = vcmp.lt.s32.totalorder %v749, %v802
      %vm815 = vcmp.lt.s32.totalorder %v750, %v802
      %vm816 = vcmp.lt.s32.totalorder %v751, %v802
      %vm817 = vcmp.lt.s32.totalorder %v752, %v802
      %vm818 = vcmp.lt.s32.totalorder %v753, %v802
      %vm819 = vcmp.lt.s32.totalorder %v754, %v802
      %vm820 = vcmp.lt.s32.totalorder %v755, %v802
      %vm821 = vcmp.lt.s32.totalorder %v756, %v802
      %vm822 = vcmp.lt.s32.totalorder %v757, %v802
      %vm823 = vcmp.lt.s32.totalorder %v758, %v802
      %vm824 = vcmp.lt.s32.totalorder %v759, %v802
      %vm825 = vcmp.lt.s32.totalorder %v760, %v802
      %vm826 = vcmp.lt.s32.totalorder %v761, %v802
      %vm827 = vcmp.lt.s32.totalorder %v762, %v802
      %vm828 = vcmp.lt.s32.totalorder %v763, %v802
      %vm829 = vcmp.lt.s32.totalorder %v764, %v802
      %vm830 = vcmp.lt.s32.totalorder %v765, %v802
      %vm831 = vcmp.lt.s32.totalorder %v766, %v802
      %vm832 = vcmp.lt.s32.totalorder %v767, %v802
      %vm833 = vcmp.lt.s32.totalorder %v768, %v802
      %vm834 = vcmp.lt.s32.totalorder %v769, %v802
      %v835 = vmul.f32 %v770, %v770
      %v836 = vmul.f32 %v771, %v771
      %v837 = vmul.f32 %v772, %v772
      %v838 = vmul.f32 %v773, %v773
      %v839 = vmul.f32 %v774, %v774
      %v840 = vmul.f32 %v775, %v775
      %v841 = vmul.f32 %v776, %v776
      %v842 = vmul.f32 %v777, %v777
      %v843 = vmul.f32 %v778, %v778
      %v844 = vmul.f32 %v779, %v779
      %v845 = vmul.f32 %v780, %v780
      %v846 = vmul.f32 %v781, %v781
      %v847 = vmul.f32 %v782, %v782
      %v848 = vmul.f32 %v783, %v783
      %v849 = vmul.f32 %v784, %v784
      %v850 = vmul.f32 %v785, %v785
      %v851 = vmul.f32 %v786, %v786
      %v852 = vmul.f32 %v787, %v787
      %v853 = vmul.f32 %v788, %v788
      %v854 = vmul.f32 %v789, %v789
      %v855 = vmul.f32 %v790, %v790
      %v856 = vmul.f32 %v791, %v791
      %v857 = vmul.f32 %v792, %v792
      %v858 = vmul.f32 %v793, %v793
      %v859 = vmul.f32 %v794, %v794
      %v860 = vmul.f32 %v795, %v795
      %v861 = vmul.f32 %v796, %v796
      %v862 = vmul.f32 %v797, %v797
      %v863 = vmul.f32 %v798, %v798
      %v864 = vmul.f32 %v799, %v799
      %v865 = vmul.f32 %v800, %v800
      %v866 = vmul.f32 %v801, %v801
      %v867 = vsel %vm803, %v835, 0.0
      %v868 = vsel %vm804, %v836, 0.0
      %v869 = vsel %vm805, %v837, 0.0
      %v870 = vsel %vm806, %v838, 0.0
      %v871 = vsel %vm807, %v839, 0.0
      %v872 = vsel %vm808, %v840, 0.0
      %v873 = vsel %vm809, %v841, 0.0
      %v874 = vsel %vm810, %v842, 0.0
      %v875 = vsel %vm811, %v843, 0.0
      %v876 = vsel %vm812, %v844, 0.0
      %v877 = vsel %vm813, %v845, 0.0
      %v878 = vsel %vm814, %v846, 0.0
      %v879 = vsel %vm815, %v847, 0.0
      %v880 = vsel %vm816, %v848, 0.0
      %v881 = vsel %vm817, %v849, 0.0
      %v882 = vsel %vm818, %v850, 0.0
      %v883 = vsel %vm819, %v851, 0.0
      %v884 = vsel %vm820, %v852, 0.0
      %v885 = vsel %vm821, %v853, 0.0
      %v886 = vsel %vm822, %v854, 0.0
      %v887 = vsel %vm823, %v855, 0.0
      %v888 = vsel %vm824, %v856, 0.0
      %v889 = vsel %vm825, %v857, 0.0
      %v890 = vsel %vm826, %v858, 0.0
      %v891 = vsel %vm827, %v859, 0.0
      %v892 = vsel %vm828, %v860, 0.0
      %v893 = vsel %vm829, %v861, 0.0
      %v894 = vsel %vm830, %v862, 0.0
      %v895 = vsel %vm831, %v863, 0.0
      %v896 = vsel %vm832, %v864, 0.0
      %v897 = vsel %vm833, %v865, 0.0
      %v898 = vsel %vm834, %v866, 0.0
      %v899 = vadd.f32 %v867, %v868
      %v900 = vadd.f32 %v899, %v869
      %v901 = vadd.f32 %v900, %v870
      %v902 = vadd.f32 %v901, %v871
      %v903 = vadd.f32 %v902, %v872
      %v904 = vadd.f32 %v903, %v873
      %v905 = vadd.f32 %v904, %v874
      %v906 = vadd.f32 %v905, %v875
      %v907 = vadd.f32 %v906, %v876
      %v908 = vadd.f32 %v907, %v877
      %v909 = vadd.f32 %v908, %v878
      %v910 = vadd.f32 %v909, %v879
      %v911 = vadd.f32 %v910, %v880
      %v912 = vadd.f32 %v911, %v881
      %v913 = vadd.f32 %v912, %v882
      %v914 = vadd.f32 %v913, %v883
      %v915 = vadd.f32 %v914, %v884
      %v916 = vadd.f32 %v915, %v885
      %v917 = vadd.f32 %v916, %v886
      %v918 = vadd.f32 %v917, %v887
      %v919 = vadd.f32 %v918, %v888
      %v920 = vadd.f32 %v919, %v889
      %v921 = vadd.f32 %v920, %v890
      %v922 = vadd.f32 %v921, %v891
      %v923 = vadd.f32 %v922, %v892
      %v924 = vadd.f32 %v923, %v893
      %v925 = vadd.f32 %v924, %v894
      %v926 = vadd.f32 %v925, %v895
      %v927 = vadd.f32 %v926, %v896
      %v928 = vadd.f32 %v927, %v897
      %v929 = vadd.f32 %v928, %v898
      %v930 = vrot.slane %v929, 4
      %v931 = vadd.f32 %v929, %v930
      %v932 = vrot.slane %v931, 2
      %v933 = vadd.f32 %v931, %v932
      %v934 = vrot.slane %v933, 1
      %v935 = vadd.f32 %v933, %v934
      %936 = vst [vmem:[%s184] sm:$0x1] %v732
      %937 = vst [vmem:[%s184 + $0x1] sm:$0x1] %v935
      %s938 = smul.u32 32, %s15
      %p939 = scmp.lt.s32.totalorder %s938, 63
      %s940 = scalar_select %p939, %s938, 63
      %s941 = smul.addr %s940, 4
      %s942 = scalar_lea.vmem %s2, %s941
      %p943 = scmp.lt.s32.totalorder %s15, 1
      %s944 = scalar_select %p943, %s15, 1
      %s945 = smul.addr %s944, 8
      %s946 = scalar_lea.vmem %s3, %s945
      // Predicated region
      $region29: #{conv_block_forward.1} parent=27 // pred_check
        %p947 = pneg %p80
      $region30: #{conv_block_forward.1} parent=27 // pred_check_branch
        %949 = sbr.rel (%p947) target = $region32
      $region31: #{conv_block_forward.1} parent=27 // pred_region
        %s950 = smul.u32 32, %s15
      $region32: #{conv_block_forward.1} parent=27 // pred_fallthru
        _
      // Predicated region
      $region33: #{conv_block_forward.1} parent=27 // pred_check
        %p951 = pneg %p106
      $region34: #{conv_block_forward.1} parent=27 // pred_check_branch
        %953 = sbr.rel (%p951) target = $region36
      $region35: #{conv_block_forward.1} parent=27 // pred_region
        _
      $region36: #{conv_block_forward.1} parent=27 // pred_fallthru
        _
    $region28: #{conv_block_forward.1} parent=5 // pred_fallthru
      _
    %p954 = scmp.le.s32.totalorder 2, %s10
    // Predicated region
    $region37: #{conv_block_forward.1} parent=5 // pred_check
      %p955 = pneg %p954
    $region38: #{conv_block_forward.1} parent=5 // pred_check_branch
      %957 = sbr.rel (%p955) target = $region40
    $region39: #{conv_block_forward.1} parent=5 // pred_region
      %s958 = ssub.s32 %s10, 2
      // Predicated region
      $region41: #{conv_block_forward.1} parent=39 // pred_check
        %p959 = pneg %p86
      $region42: #{conv_block_forward.1} parent=39 // pred_check_branch
        %961 = sbr.rel (%p959) target = $region44
      $region43: #{conv_block_forward.1} parent=39 // pred_region
        %s962 = smul.u32 32, %s16
        %p963 = scmp.lt.s32.totalorder %s962, 63
        %s964 = scalar_select %p963, %s962, 63
        %s965 = smul.addr %s964, 4
        %s966 = scalar_lea.vmem %s2, %s965
      $region44: #{conv_block_forward.1} parent=39 // pred_fallthru
        _
      // Predicated region
      $region45: #{conv_block_forward.1} parent=39 // pred_check
        %p967 = pneg %p112
      $region46: #{conv_block_forward.1} parent=39 // pred_check_branch
        %969 = sbr.rel (%p967) target = $region48
      $region47: #{conv_block_forward.1} parent=39 // pred_region
        %p970 = scmp.lt.s32.totalorder %s16, 1
        %s971 = scalar_select %p970, %s16, 1
        %s972 = smul.addr %s971, 8
        %s973 = scalar_lea.vmem %s3, %s972
      $region48: #{conv_block_forward.1} parent=39 // pred_fallthru
        _
    $region40: #{conv_block_forward.1} parent=5 // pred_fallthru
      _
  $region6: #{conv_block_forward.1} parent=0 // loop_footer
    %s14 = sadd.s32 1, %s10
  $region7: #{conv_block_forward.1} parent=0 // loop_footer_branch
    %9 = sbr.rel target = $region3
  $region8: #{conv_block_forward.1} parent=0 // loop_exit
    _

</llo_original>
